<compile_context>
chip_gen: v7x
topology: tpu7x:2x2x1
jax: 0.10.0
libtpu: 0.0.40
codegen_flags: <defaults>
</compile_context>

<pallas_src>
import functools

import jax
import jax.numpy as jnp
from jax.experimental import pallas as pl
from jax.experimental.pallas import tpu as pltpu


def _round_up(x, m):
    return ((x + m - 1) // m) * m


def _cdiv(a, b):
    return (a + b - 1) // b


def _derive_tiling(D, tk_max, n_split):
    """Pick (tk, nk_per_split, n_split, d_pad) for the K reduction.

    D is padded to a multiple of 128 (not of tk): choose nk first (multiple of
    n_split, tk <= tk_max), then tk = round_up(ceil(D128/nk), 128).  Wasted
    (zero) columns per K tile are < 128.
    """
    D128 = _round_up(D, 128)
    if D128 < n_split * 128:
        n_split = 1
    nk = _round_up(_cdiv(D128, tk_max), n_split)
    tk = _round_up(_cdiv(D128, nk), 128)
    d_pad = nk * tk
    return tk, nk // n_split, n_split, d_pad


def _mimlp_partial_kernel(x_ref, w1_ref, part_ref):
    # x_ref:    (B, TK)    bf16  activation K-tile
    # w1_ref:   (TK, NC)   bf16  W1 K-tile (pre-transposed, pre-padded)
    # part_ref: (1, B, NC) f32   per-split partial accumulator (resident over k)
    k = pl.program_id(1)

    @pl.when(k == 0)
    def _():
        part_ref[...] = jnp.zeros_like(part_ref)

    # K-partial of the first Linear: bf16 x bf16 on the MXU, f32 accumulate,
    # accumulated directly into the (resident) output block.
    part_ref[...] += jnp.dot(
        x_ref[...], w1_ref[...], preferred_element_type=jnp.float32
    )[None, :, :]


@functools.partial(jax.jit, static_argnames=("tk", "nkps", "n_split", "d_pad"))
def mimlp_apply(x_flat, w1_padded, b1, w2, b2, *, tk, nkps, n_split, d_pad):
    """Fused (Linear -> ReLU -> Linear -> L2-norm) for one flattened feature.

    x_flat:    (B, D)     bf16
    w1_padded: (d_pad, NC) bf16  (zero-padded rows beyond D, padded at init)
    b1, b2:    (1, NC)    f32
    w2:        (NC, NC)   f32
    Returns (B, NC) f32.
    """
    B, D = x_flat.shape
    NC = w1_padded.shape[1]
    assert w1_padded.shape[0] == d_pad

    # Pad x columns with zeros (cheap: B is tiny and x is bf16).  Both x cols
    # and W1 rows in the tail are zero, so the padded tail contributes 0.
    if D != d_pad:
        x_flat = jnp.pad(x_flat, ((0, 0), (0, d_pad - D)))

    w1_tile_bytes = tk * NC * 2          # bf16
    x_tile_bytes = B * tk * 2            # bf16
    out_block_bytes = B * NC * 4         # f32

    w1_kwargs = {}
    nbuf = 2
    if nkps > 1:
        # Deeper pipelining on the dominant (W1) stream; drop to 2 buffers
        # once the tile itself is large enough to hide the fixed overhead.
        nbuf = 2 if w1_tile_bytes >= (4 << 20) else 3
        nbuf = max(2, min(nbuf, nkps))
        w1_kwargs["pipeline_mode"] = pl.Buffered(nbuf)

    # VMEM budget derived from the tiles actually used (never the physical
    # max), plus 4 MiB slack for Mosaic internal scratch.  The epilogue
    # tensors (W2, biases) are no longer kernel inputs, so no resident
    # double-buffering to account for.
    vmem_limit = int(
        nbuf * w1_tile_bytes + 2 * x_tile_bytes + 2 * out_block_bytes + (4 << 20)
    )

    grid_spec = pltpu.PrefetchScalarGridSpec(
        num_scalar_prefetch=0,
        grid=(n_split, nkps),                                         # (split, K)
        in_specs=[
            pl.BlockSpec((B, tk), lambda c, k: (0, c * nkps + k)),    # x:  K-tiled
            pl.BlockSpec((tk, NC), lambda c, k: (c * nkps + k, 0),    # W1: K-tiled
                         **w1_kwargs),
        ],
        out_specs=pl.BlockSpec((1, B, NC), lambda c, k: (c, 0, 0)),   # per-split acc
    )

    partials = pl.pallas_call(
        _mimlp_partial_kernel,
        out_shape=jax.ShapeDtypeStruct((n_split, B, NC), jnp.float32),
        grid_spec=grid_spec,
        compiler_params=pltpu.CompilerParams(
            dimension_semantics=("parallel", "arbitrary"),  # split || , K reduction
            vmem_limit_bytes=vmem_limit,
        ),
    )(x_flat, w1_padded)

    # Tiny epilogue (runs in the same jitted program): combine split partials,
    # bias1 + ReLU, second Linear, bias2, L2 normalization.
    acc = jnp.sum(partials, axis=0)                       # (B, NC) f32
    h = jnp.maximum(acc + b1, 0.0)
    y = jnp.dot(h, w2, preferred_element_type=jnp.float32) + b2
    norm = jnp.sqrt(jnp.sum(y * y, axis=1, keepdims=True))
    return y / (norm + 1e-7)


class MIMLPPallas:
    """JAX/Pallas port of MIMLP (use_mlp=True)."""

    def __init__(self, nc=256, init_gain=0.02, seed=0, tk_max=8192, n_split=2):
        assert tk_max % 128 == 0, "tk_max must be a multiple of 128 (lane width)"
        assert n_split >= 1
        self.nc = nc
        self.init_gain = init_gain
        self.seed = seed
        self.tk_max = tk_max
        self.n_split = n_split
        self.mlp_init = False
        self.params = []    # list of (w1_padded, b1, w2, b2) per feat
        self.tilings = []   # list of (tk, nkps, n_split, d_pad) per feat

    def create_mlp(self, feats):
        key = jax.random.PRNGKey(self.seed)
        self.params = []
        self.tilings = []
        for feat in feats:
            _, C, H, W = feat.shape
            D = C * H * W
            tiling = _derive_tiling(D, self.tk_max, self.n_split)
            tk, nkps, n_split, d_pad = tiling
            key, k1, k2 = jax.random.split(key, 3)
            # nn.Linear(D, nc): weight (nc, D), stored pre-transposed (D, nc).
            # Normal(0, init_gain) init, zero bias (init_net(..., 'normal', 0.02)).
            # W1 is stored bf16 (dominant HBM stream of a mem-bound kernel) and
            # ZERO-PADDED ONCE here to d_pad so forward never copies it again.
            w1 = (self.init_gain
                  * jax.random.normal(k1, (D, self.nc), dtype=jnp.float32)
                  ).astype(jnp.bfloat16)
            if d_pad != D:
                w1 = jnp.pad(w1, ((0, d_pad - D), (0, 0)))
            b1 = jnp.zeros((1, self.nc), jnp.float32)
            w2 = (self.init_gain
                  * jax.random.normal(k2, (self.nc, self.nc), dtype=jnp.float32))
            b2 = jnp.zeros((1, self.nc), jnp.float32)
            self.params.append((w1, b1, w2, b2))
            self.tilings.append(tiling)
        self.mlp_init = True

    def forward(self, feats):
        if not self.mlp_init:
            self.create_mlp(feats)
        return_feats = []
        for feat, (w1, b1, w2, b2), (tk, nkps, n_split, d_pad) in zip(
                feats, self.params, self.tilings):
            B = feat.shape[0]
            # NCHW flatten (glue) + bf16 activation stream (replaces the old
            # f32 cast; halves the x DMA and drops the in-kernel cast).
            x_flat = feat.reshape(B, -1).astype(jnp.bfloat16)
            return_feats.append(
                mimlp_apply(x_flat, w1, b1, w2, b2,
                            tk=tk, nkps=nkps, n_split=n_split, d_pad=d_pad))
        return return_feats


def _reference(feats, params):
    """Pure-JAX reference using the same precision policy as the kernel."""
    outs = []
    for feat, (w1, b1, w2, b2) in zip(feats, params):
        B = feat.shape[0]
        x = feat.reshape(B, -1).astype(jnp.bfloat16)
        D = x.shape[1]
        h = jnp.dot(x, w1[:D], preferred_element_type=jnp.float32) + b1
        h = jnp.maximum(h, 0.0)
        y = jnp.dot(h, w2, preferred_element_type=jnp.float32) + b2
        norm = jnp.sqrt(jnp.sum(y * y, axis=1, keepdims=True))
        outs.append(y / (norm + 1e-7))
    return outs


if __name__ == "__main__":
    key = jax.random.PRNGKey(0)
    k0, k1 = jax.random.split(key)
    # Small NCHW feature maps consistent with the module's forward.
    feat0 = jax.random.normal(k0, (2, 4, 16, 16), dtype=jnp.float32)  # D = 1024
    feat1 = jax.random.normal(k1, (2, 8, 8, 8), dtype=jnp.float32)    # D = 512

    feats = [feat0, feat1]

    # Small tk_max so the multi-K-tile accumulate path AND the split-K
    # (n_split=2) path are both exercised at these toy sizes
    # (feat0 -> 2 splits x 2 K-tiles, feat1 -> 2 splits x 1 K-tile).
    # Production use keeps the default tk_max=8192.
    model = MIMLPPallas(nc=128, init_gain=0.02, seed=0, tk_max=256, n_split=2)
    outs = model.forward(feats)
    outs = [jax.block_until_ready(o) for o in outs]

    # Sanity check against the pure-JAX reference.
    refs = _reference(feats, model.params)
    for o, r in zip(outs, refs):
        assert o.shape == r.shape
        assert jnp.allclose(o, r, atol=1e-5, rtol=1e-4), "mismatch vs reference"

    print("KERNEL_OK")
</pallas_src>

<mosaic_0001>
module attributes {stable_mosaic.version = 11 : i64} {
  func.func @_mimlp_partial_kernel(%arg0: i32, %arg1: i32, %arg2: memref<2x256xbf16, #tpu.memory_space<vmem>>, %arg3: memref<256x128xbf16, #tpu.memory_space<vmem>>, %arg4: memref<1x2x128xf32, #tpu.memory_space<vmem>>) attributes {dimension_semantics = [#tpu.dimension_semantics<parallel>, #tpu.dimension_semantics<arbitrary>], iteration_bounds = array<i64: 2, 2>, scalar_prefetch = 0 : i64, scratch_operands = 0 : i64, tpu.core_type = #tpu.core_type<tc>, window_params = [{transform_indices = @transform_0, window_bounds = array<i64: 2, 256>}, {pipeline_mode = #tpu.pipeline_mode<double_buffered>, transform_indices = @transform_1, window_bounds = array<i64: 256, 128>}, {transform_indices = @transform_2, window_bounds = array<i64: 1, 2, 128>}]} {
    %c0_i32 = arith.constant 0 : i32
    %0 = arith.cmpi eq, %arg1, %c0_i32 : i32
    %1 = arith.extui %0 : i1 to i32
    %c0_i32_0 = arith.constant 0 : i32
    %2 = arith.cmpi ne, %1, %c0_i32_0 : i32
    scf.if %2 {
      %cst_10 = arith.constant 0.000000e+00 : f32
      %10 = vector.broadcast %cst_10 : f32 to vector<1x2x128xf32>
      %c0_11 = arith.constant 0 : index
      %c0_12 = arith.constant 0 : index
      %c0_13 = arith.constant 0 : index
      %11 = vector.load %arg4[%c0_11, %c0_12, %c0_13] : memref<1x2x128xf32, #tpu.memory_space<vmem>>, vector<1x2x128xf32>
      tpu.vector_store %arg4[%c0_11, %c0_12, %c0_13], %10 {strides = array<i32>} : memref<1x2x128xf32, #tpu.memory_space<vmem>>, vector<1x2x128xf32>,
    } else {
    }
    %c0 = arith.constant 0 : index
    %c0_1 = arith.constant 0 : index
    %c0_2 = arith.constant 0 : index
    %3 = vector.load %arg4[%c0, %c0_1, %c0_2] : memref<1x2x128xf32, #tpu.memory_space<vmem>>, vector<1x2x128xf32>
    %c0_3 = arith.constant 0 : index
    %c0_4 = arith.constant 0 : index
    %4 = vector.load %arg2[%c0_3, %c0_4] : memref<2x256xbf16, #tpu.memory_space<vmem>>, vector<2x256xbf16>
    %c0_5 = arith.constant 0 : index
    %c0_6 = arith.constant 0 : index
    %5 = vector.load %arg3[%c0_5, %c0_6] : memref<256x128xbf16, #tpu.memory_space<vmem>>, vector<256x128xbf16>
    %cst = arith.constant dense<0.000000e+00> : vector<2x128xf32>
    %6 = tpu.matmul %4, %5, %cst {dimension_numbers = #tpu.dot_dimension_numbers<[1], [0], [0], [1], [0, 0, 1, 1], [], []>} : vector<2x256xbf16>, vector<256x128xbf16>, vector<2x128xf32> -> vector<2x128xf32>
    %7 = vector.shape_cast %6 : vector<2x128xf32> to vector<1x2x128xf32>
    %8 = arith.addf %3, %7 : vector<1x2x128xf32>
    %c0_7 = arith.constant 0 : index
    %c0_8 = arith.constant 0 : index
    %c0_9 = arith.constant 0 : index
    %9 = vector.load %arg4[%c0_7, %c0_8, %c0_9] : memref<1x2x128xf32, #tpu.memory_space<vmem>>, vector<1x2x128xf32>
    tpu.vector_store %arg4[%c0_7, %c0_8, %c0_9], %8 {strides = array<i32>} : memref<1x2x128xf32, #tpu.memory_space<vmem>>, vector<1x2x128xf32>,
    return
  }
  func.func @transform_0(%arg0: i32, %arg1: i32) -> (i32, i32) {
    %c2_i32 = arith.constant 2 : i32
    %0 = arith.muli %arg0, %c2_i32 : i32
    %1 = arith.addi %0, %arg1 : i32
    %c0_i32 = arith.constant 0 : i32
    %c0_i32_0 = arith.constant 0 : i32
    return %c0_i32, %1 : i32, i32
  }
  func.func @transform_1(%arg0: i32, %arg1: i32) -> (i32, i32) {
    %c2_i32 = arith.constant 2 : i32
    %0 = arith.muli %arg0, %c2_i32 : i32
    %1 = arith.addi %0, %arg1 : i32
    %c0_i32 = arith.constant 0 : i32
    %c0_i32_0 = arith.constant 0 : i32
    return %1, %c0_i32 : i32, i32
  }
  func.func @transform_2(%arg0: i32, %arg1: i32) -> (i32, i32, i32) {
    %c0_i32 = arith.constant 0 : i32
    %c0_i32_0 = arith.constant 0 : i32
    %c0_i32_1 = arith.constant 0 : i32
    return %arg0, %c0_i32, %c0_i32_0 : i32, i32, i32
  }
}

</mosaic_0001>

<llo_original>
// kernel: mimlp_apply.1
$region0: #{mimlp_apply.1}
  #allocation0 [shape = 'u32[]', space=smem, size = 0x4, offset = 0x4, fixed_abs, tag = 'smem constant byte address 0x4 - core index']
  #allocation1 [shape = 'u32[144,128]{1,0:T(1,128)}', space=vmem, size = 0x12000, scoped, tag = 'internal scratch']
  %s0 = inlined_call_operand.hbm [shape: bf16[2,1024], index: 0, kind: input, shape index: {}]
  %s1 = inlined_call_operand.hbm [shape: bf16[1024,128], index: 1, kind: input, shape index: {}]
  %s2 = inlined_call_operand.vmem [shape: f32[2,2,128], index: 2, kind: output, shape index: {}]
  %s3 = sld [smem:[#allocation0]]
  $region53: #{mimlp_apply.1} parent=0
    _
  %s5 = ssub.s32 1, %s3
  %s6 = scalar_select 0, %s5, %s3
  $region1: #{mimlp_apply.1} parent=0
    #allocation2 [shape = 'u8[2048]{0}', space=vmem, size = 0x800, scoped, tag = 'input window, operand 0']
    #allocation3 [shape = 's32[2]{0}', space=sflag, size = 0x8, scoped, tag = 'scoped memory for mimlp_apply.1']
    #allocation4 [shape = 'u8[131072]{0}', space=vmem, size = 0x20000, scoped, tag = 'input window, operand 1']
    #allocation5 [shape = 's32[2]{0}', space=sflag, size = 0x8, scoped, tag = 'scoped memory for mimlp_apply.1']
    %7 = vsyncpa [#allocation3], 0
    %s8 = scalar_lea.sflag [#allocation3], 1
    %9 = vsyncpa %s8, 0
    %10 = vsyncpa [#allocation5], 0
    %s11 = scalar_lea.sflag [#allocation5], 1
    %12 = vsyncpa %s11, 0
    loop: start=0, step=1, limit=6
    $region2: #{mimlp_apply.1} parent=1 // loop_pre_header
      _
    $region3: #{mimlp_apply.1} parent=1 // loop_header
      %s14 = sphi 0, %s18
      %p15 = scmp.ge.s32.totalorder %s14, 6
      %s21 = sphi 0, %s33
      %s22 = sphi 0, %s29
      %s23 = sphi 0, %s21
      %s24 = sphi 0, %s22
      %s25 = sphi 0, %s23
      %s26 = sphi 0, %s24
      %s40 = sphi 0, %s42
      %s43 = sphi 0, %s40
      %s44 = sphi 0, %s43
      %s60 = sphi 0, %s44
      %s70 = sphi 0, %s72
      %s73 = sphi 0, %s70
      %s74 = sphi 0, %s73
      %s90 = sphi 0, %s74
      %s96 = sphi 0, %s98
      %s99 = sphi 0, %s96
      %s100 = sphi 0, %s99
      %s116 = sphi 0, %s100
    $region4: #{mimlp_apply.1} parent=1 // loop_header_branch
      %17 = sbr.rel (%p15) target = $region8
    $region5: #{mimlp_apply.1} parent=1 // loop_body
      %s19 = ssub.s32 %s14, 1
      %s20 = ssub.s32 %s14, 2
      %s27 = sadd.s32 1, %s22
      %p28 = scmp.ge.s32.totalorder %s27, 2
      %s29 = scalar_select %p28, 0, %s27
      %s30 = sadd.s32 1, %s21
      %s31 = scalar_select %p28, %s30, %s21
      %p32 = scmp.ge.s32.totalorder %s31, 2
      %s33 = scalar_select %p32, 0, %s31
      %s34 = smul.u32 %s21, 2
      %s35 = sadd.s32 %s34, %s22
      %s36 = smul.u32 %s33, 2
      %s37 = sadd.s32 %s36, %s29
      %s38 = ssub.s32 %s35, %s37
      %p39 = scmp.eq.s32.totalorder %s38, 0
      %s41 = sadd.s32 %s40, 1
      %s42 = scalar_select %p39, %s40, %s41
      %p45 = pneg %p39
      %p46 = scmp.eq.s32.totalorder %s14, 3
      %p47 = por %p45, %p46
      %p48 = scmp.ne.s32.totalorder %s40, %s43
      %p49 = scmp.eq.s32.totalorder %s14, 0
      %p50 = por %p48, %p49
      %p51 = scmp.ne.s32.totalorder %s40, %s43
      %p52 = scmp.eq.s32.totalorder %s19, 3
      %p53 = por %p51, %p52
      %p54 = scmp.ne.s32.totalorder %s43, %s44
      %p55 = scmp.eq.s32.totalorder %s19, 0
      %p56 = por %p54, %p55
      %p57 = scmp.ne.s32.totalorder %s43, %s44
      %p58 = scmp.eq.s32.totalorder %s20, 3
      %p59 = por %p57, %p58
      %p61 = scmp.ne.s32.totalorder %s44, %s60
      %p62 = scmp.eq.s32.totalorder %s20, 0
      %p63 = por %p61, %p62
      %s64 = smul.u32 %s21, 2
      %s65 = sadd.s32 %s64, %s22
      %s66 = smul.u32 %s33, 2
      %s67 = sadd.s32 %s66, %s29
      %s68 = ssub.s32 %s65, %s67
      %p69 = scmp.eq.s32.totalorder %s68, 0
      %s71 = sadd.s32 %s70, 1
      %s72 = scalar_select %p69, %s70, %s71
      %p75 = pneg %p69
      %p76 = scmp.eq.s32.totalorder %s14, 3
      %p77 = por %p75, %p76
      %p78 = scmp.ne.s32.totalorder %s70, %s73
      %p79 = scmp.eq.s32.totalorder %s14, 0
      %p80 = por %p78, %p79
      %p81 = scmp.ne.s32.totalorder %s70, %s73
      %p82 = scmp.eq.s32.totalorder %s19, 3
      %p83 = por %p81, %p82
      %p84 = scmp.ne.s32.totalorder %s73, %s74
      %p85 = scmp.eq.s32.totalorder %s19, 0
      %p86 = por %p84, %p85
      %p87 = scmp.ne.s32.totalorder %s73, %s74
      %p88 = scmp.eq.s32.totalorder %s20, 3
      %p89 = por %p87, %p88
      %p91 = scmp.ne.s32.totalorder %s74, %s90
      %p92 = scmp.eq.s32.totalorder %s20, 0
      %p93 = por %p91, %p92
      %s94 = ssub.s32 %s21, %s33
      %p95 = scmp.eq.s32.totalorder %s94, 0
      %s97 = sadd.s32 %s96, 1
      %s98 = scalar_select %p95, %s96, %s97
      %p101 = pneg %p95
      %p102 = scmp.eq.s32.totalorder %s14, 3
      %p103 = por %p101, %p102
      %p104 = scmp.ne.s32.totalorder %s96, %s99
      %p105 = scmp.eq.s32.totalorder %s14, 0
      %p106 = por %p104, %p105
      %p107 = scmp.ne.s32.totalorder %s96, %s99
      %p108 = scmp.eq.s32.totalorder %s19, 3
      %p109 = por %p107, %p108
      %p110 = scmp.ne.s32.totalorder %s99, %s100
      %p111 = scmp.eq.s32.totalorder %s19, 0
      %p112 = por %p110, %p111
      %p113 = scmp.ne.s32.totalorder %s99, %s100
      %p114 = scmp.eq.s32.totalorder %s20, 3
      %p115 = por %p113, %p114
      %p117 = scmp.ne.s32.totalorder %s100, %s116
      %p118 = scmp.eq.s32.totalorder %s20, 0
      %p119 = por %p117, %p118
      %p120 = scmp.le.s32.totalorder 1, %s14
      %p121 = scmp.lt.s32.totalorder %s14, 5
      %p122 = pnand %p120, %p121
      %p123 = pneg %p122
      // Predicated region
      $region9: #{mimlp_apply.1} parent=5 // pred_check
        _
      $region10: #{mimlp_apply.1} parent=5 // pred_check_branch
        %125 = sbr.rel (%p122) target = $region12
      $region11: #{mimlp_apply.1} parent=5 // pred_region
        %s126 = ssub.s32 %s14, 1
      $region12: #{mimlp_apply.1} parent=5 // pred_fallthru
        _
      %p127 = scmp.lt.s32.totalorder %s14, 4
      // Predicated region
      $region13: #{mimlp_apply.1} parent=5 // pred_check
        %p128 = pneg %p127
      $region14: #{mimlp_apply.1} parent=5 // pred_check_branch
        %130 = sbr.rel (%p128) target = $region16
      $region15: #{mimlp_apply.1} parent=5 // pred_region
        // Predicated region
        $region17: #{mimlp_apply.1} parent=15 // pred_check
          %p131 = pneg %p50
        $region18: #{mimlp_apply.1} parent=15 // pred_check_branch
          %133 = sbr.rel (%p131) target = $region20
        $region19: #{mimlp_apply.1} parent=15 // pred_region
          %s134 = sand.u32 %s40, 1
          %s135 = scalar_lea.sflag [#allocation3], %s134
          %s136 = sand.u32 %s40, 1
          %s137 = smul.addr %s136, 2
          %s138 = scalar_lea.vmem [#allocation2], %s137
          %s139 = smul.u32 %s21, 2
          %s140 = sadd.s32 %s139, %s22
          %s141 = smul.u32 2, %s140
          %s143 = ssub.s32 32, 32
          %144 = vsyncadd %s135, %s143
          %s145 = smul.addr %s141, 16
          %s146 = scalar_lea.hbm %s0, %s145
          %s148 = sshll.u32 %s138, 4
          %s149 = int_to_ptr.vmem [resolvable:$true] %s148
          %151 = dma.hbm_to_vmem [thread:$0]  %s146, 32, %s149, %s135
        $region20: #{mimlp_apply.1} parent=15 // pred_fallthru
          _
        // Predicated region
        $region21: #{mimlp_apply.1} parent=15 // pred_check
          %p152 = pneg %p80
        $region22: #{mimlp_apply.1} parent=15 // pred_check_branch
          %154 = sbr.rel (%p152) target = $region24
        $region23: #{mimlp_apply.1} parent=15 // pred_region
          %s155 = sand.u32 %s70, 1
          %s156 = scalar_lea.sflag [#allocation5], %s155
          %s157 = sand.u32 %s70, 1
          %s158 = smul.addr %s157, 128
          %s159 = scalar_lea.vmem [#allocation4], %s158
          %s160 = smul.u32 %s21, 2
          %s161 = sadd.s32 %s160, %s22
          %s162 = smul.u32 32, %s161
          %s164 = ssub.s32 2048, 2048
          %165 = vsyncadd %s156, %s164
          %s166 = smul.addr %s162, 64
          %s167 = scalar_lea.hbm %s1, %s166
          %s168 = sshll.u32 %s159, 4
          %s169 = int_to_ptr.vmem [resolvable:$true] %s168
          %174 = dma.hbm_to_vmem [thread:$0]  %s167, 2048, %s169, %s156, 64, 64, 4
        $region24: #{mimlp_apply.1} parent=15 // pred_fallthru
          _
      $region16: #{mimlp_apply.1} parent=5 // pred_fallthru
        _
      %p175 = scmp.le.s32.totalorder 1, %s14
      %p176 = scmp.lt.s32.totalorder %s14, 5
      %p177 = pnand %p175, %p176
      %p178 = pneg %p177
      // Predicated region
      $region25: #{mimlp_apply.1} parent=5 // pred_check
        _
      $region26: #{mimlp_apply.1} parent=5 // pred_check_branch
        %180 = sbr.rel (%p177) target = $region28
      $region27: #{mimlp_apply.1} parent=5 // pred_region
        %s181 = ssub.s32 %s14, 1
        %s182 = sand.u32 %s43, 1
        %s183 = scalar_lea.sflag [#allocation3], %s182
        %s184 = sand.u32 %s43, 1
        %s185 = smul.addr %s184, 2
        %s186 = scalar_lea.vmem [#allocation2], %s185
        // Predicated region
        $region29: #{mimlp_apply.1} parent=27 // pred_check
          %p187 = pneg %p56
        $region30: #{mimlp_apply.1} parent=27 // pred_check_branch
          %189 = sbr.rel (%p187) target = $region32
        $region31: #{mimlp_apply.1} parent=27 // pred_region
          %190 = dma.done %s183, 32
        $region32: #{mimlp_apply.1} parent=27 // pred_fallthru
          _
        %s191 = sand.u32 %s73, 1
        %s192 = scalar_lea.sflag [#allocation5], %s191
        %s193 = sand.u32 %s73, 1
        %s194 = smul.addr %s193, 128
        %s195 = scalar_lea.vmem [#allocation4], %s194
        // Predicated region
        $region33: #{mimlp_apply.1} parent=27 // pred_check
          %p196 = pneg %p86
        $region34: #{mimlp_apply.1} parent=27 // pred_check_branch
          %198 = sbr.rel (%p196) target = $region36
        $region35: #{mimlp_apply.1} parent=27 // pred_region
          %199 = dma.done %s192, 2048
        $region36: #{mimlp_apply.1} parent=27 // pred_fallthru
          _
        %s200 = sand.u32 %s43, 1
        %s201 = scalar_lea.sflag [#allocation3], %s200
        %s202 = sand.u32 %s43, 1
        %s203 = smul.addr %s202, 2
        %s204 = scalar_lea.vmem [#allocation2], %s203
        %p205 = pneg %p56
        %p206 = pneg %p53
        %s207 = sand.u32 %s73, 1
        %s208 = scalar_lea.sflag [#allocation5], %s207
        %s209 = sand.u32 %s73, 1
        %s210 = smul.addr %s209, 128
        %s211 = scalar_lea.vmem [#allocation4], %s210
        %p212 = pneg %p86
        %p213 = pneg %p83
        %p214 = pneg %p112
        %p215 = pneg %p109
        %p216 = scmp.lt.s32.totalorder %s23, 1
        %s217 = scalar_select %p216, %s23, 1
        %s218 = smul.addr %s217, 2
        %s219 = scalar_lea.vmem %s2, %s218
        %s220 = smul.u32 %s23, 2
        %s221 = sadd.s32 %s220, %s24
        %s222 = smul.u32 2, %s221
        %s223 = smul.u32 %s23, 2
        %s224 = sadd.s32 %s223, %s24
        %s225 = smul.u32 32, %s224
        %p226 = scmp.lt.s32.totalorder %s23, 1
        %s227 = scalar_select %p226, %s23, 1
        %s228 = smul.addr %s227, 2
        %s229 = scalar_lea.vmem %s2, %s228
        %p231 = scmp.eq.s32.totalorder %s24, 0
        // Predicated region
        $region37: #{mimlp_apply.1} parent=27 // pred_check
          %p232 = pneg %p231
        $region38: #{mimlp_apply.1} parent=27 // pred_check_branch
          %234 = sbr.rel (%p232) target = $region40
        $region39: #{mimlp_apply.1} parent=27 // pred_region
          %235 = vst [vmem:[%s229] sm:$0x3] 0.0
        $region40: #{mimlp_apply.1} parent=27 // pred_fallthru
          _
        %v236 = vld [vmem:[%s229] sm:$0x3]
        %v237 = vld [vmem:[%s186] sm:$0x3]
        %v238 = vld [vmem:[%s195] sm:$0xf]
        %v239 = vld [vmem:[%s195 + $0x4] sm:$0xf]
        %v240 = vld [vmem:[%s195 + $0x8] sm:$0xf]
        %v241 = vld [vmem:[%s195 + $0xc] sm:$0xf]
        %v242 = vld [vmem:[%s195 + $0x10] sm:$0xf]
        %v243 = vld [vmem:[%s195 + $0x14] sm:$0xf]
        %v244 = vld [vmem:[%s195 + $0x18] sm:$0xf]
        %v245 = vld [vmem:[%s195 + $0x1c] sm:$0xf]
        %v246 = vld [vmem:[%s195 + $0x20] sm:$0xf]
        %v247 = vld [vmem:[%s195 + $0x24] sm:$0xf]
        %v248 = vld [vmem:[%s195 + $0x28] sm:$0xf]
        %v249 = vld [vmem:[%s195 + $0x2c] sm:$0xf]
        %v250 = vld [vmem:[%s195 + $0x30] sm:$0xf]
        %v251 = vld [vmem:[%s195 + $0x34] sm:$0xf]
        %v252 = vld [vmem:[%s195 + $0x38] sm:$0xf]
        %v253 = vld [vmem:[%s195 + $0x3c] sm:$0xf]
        %v254 = vld [vmem:[%s195 + $0x40] sm:$0xf]
        %v255 = vld [vmem:[%s195 + $0x44] sm:$0xf]
        %v256 = vld [vmem:[%s195 + $0x48] sm:$0xf]
        %v257 = vld [vmem:[%s195 + $0x4c] sm:$0xf]
        %v258 = vld [vmem:[%s195 + $0x50] sm:$0xf]
        %v259 = vld [vmem:[%s195 + $0x54] sm:$0xf]
        %v260 = vld [vmem:[%s195 + $0x58] sm:$0xf]
        %v261 = vld [vmem:[%s195 + $0x5c] sm:$0xf]
        %v262 = vld [vmem:[%s195 + $0x60] sm:$0xf]
        %v263 = vld [vmem:[%s195 + $0x64] sm:$0xf]
        %v264 = vld [vmem:[%s195 + $0x68] sm:$0xf]
        %v265 = vld [vmem:[%s195 + $0x6c] sm:$0xf]
        %v266 = vld [vmem:[%s195 + $0x70] sm:$0xf]
        %v267 = vld [vmem:[%s195 + $0x74] sm:$0xf]
        %v268 = vld [vmem:[%s195 + $0x78] sm:$0xf]
        %v269 = vld [vmem:[%s195 + $0x7c] sm:$0xf]
        %v272 = vunpack.c.l.s4 1966171168
        %v273 = vunpack.c.0.s8 %v272
        %v274 = vlaneseq
        %v275 = vshrl.u32 %v274, 7
        %v276 = vsub.s32 %v273, %v275
        %v277 = vrot.slane %v237, %v276
        %v278 = vcombine.high %v277, %v277
        %v280 = vunpack.c.l.s4 1966171168
        %v281 = vunpack.c.0.s8 %v280
        %v282 = vlaneseq
        %v283 = vshrl.u32 %v282, 7
        %v284 = vsub.s32 %v281, %v283
        %v285 = vrot.slane %v277, %v284
        %v287 = vunpack.c.l.s4 1966171168
        %v288 = vunpack.c.0.s8 %v287
        %v289 = vlaneseq
        %v290 = vshrl.u32 %v289, 7
        %v291 = vsub.s32 %v288, %v290
        %v292 = vrot.slane %v278, %v291
        %v327 = vunpack.c.l.b16 %v238
        %v328 = vunpack.c.l.b16 %v239
        %v329 = vunpack.c.l.b16 %v240
        %v330 = vunpack.c.l.b16 %v241
        %v331 = vunpack.c.l.b16 %v242
        %v332 = vunpack.c.l.b16 %v243
        %v333 = vunpack.c.l.b16 %v244
        %v334 = vunpack.c.l.b16 %v245
        %v335 = vunpack.c.l.b16 %v246
        %v336 = vunpack.c.l.b16 %v247
        %v337 = vunpack.c.l.b16 %v248
        %v338 = vunpack.c.l.b16 %v249
        %v339 = vunpack.c.l.b16 %v250
        %v340 = vunpack.c.l.b16 %v251
        %v341 = vunpack.c.l.b16 %v252
        %v342 = vunpack.c.l.b16 %v253
        %v343 = vunpack.c.l.b16 %v254
        %v344 = vunpack.c.l.b16 %v255
        %v345 = vunpack.c.l.b16 %v256
        %v346 = vunpack.c.l.b16 %v257
        %v347 = vunpack.c.l.b16 %v258
        %v348 = vunpack.c.l.b16 %v259
        %v349 = vunpack.c.l.b16 %v260
        %v350 = vunpack.c.l.b16 %v261
        %v351 = vunpack.c.l.b16 %v262
        %v352 = vunpack.c.l.b16 %v263
        %v353 = vunpack.c.l.b16 %v264
        %v354 = vunpack.c.l.b16 %v265
        %v355 = vunpack.c.l.b16 %v266
        %v356 = vunpack.c.l.b16 %v267
        %v357 = vunpack.c.l.b16 %v268
        %v358 = vunpack.c.l.b16 %v269
        %v359 = vpack.c.b16 %v328, %v327
        %v360 = vpack.c.b16 %v330, %v329
        %v361 = vpack.c.b16 %v332, %v331
        %v362 = vpack.c.b16 %v334, %v333
        %v363 = vpack.c.b16 %v336, %v335
        %v364 = vpack.c.b16 %v338, %v337
        %v365 = vpack.c.b16 %v340, %v339
        %v366 = vpack.c.b16 %v342, %v341
        %v367 = vpack.c.b16 %v344, %v343
        %v368 = vpack.c.b16 %v346, %v345
        %v369 = vpack.c.b16 %v348, %v347
        %v370 = vpack.c.b16 %v350, %v349
        %v371 = vpack.c.b16 %v352, %v351
        %v372 = vpack.c.b16 %v354, %v353
        %v373 = vpack.c.b16 %v356, %v355
        %v374 = vpack.c.b16 %v358, %v357
        %391 = vmatprep.subr.bf16.mxu0 0
        %392 = vmatpush1.bf16.msra.mxu0 %v359
        %393 = vmatprep.subr.bf16.mxu0 0
        %394 = vmatpush1.bf16.msra.mxu0 %v360
        %395 = vmatprep.subr.bf16.mxu0 0
        %396 = vmatpush1.bf16.msra.mxu0 %v361
        %397 = vmatprep.subr.bf16.mxu0 0
        %398 = vmatpush1.bf16.msra.mxu0 %v362
        %399 = vmatprep.subr.bf16.mxu0 0
        %400 = vmatpush1.bf16.msra.mxu0 %v363
        %401 = vmatprep.subr.bf16.mxu0 0
        %402 = vmatpush1.bf16.msra.mxu0 %v364
        %403 = vmatprep.subr.bf16.mxu0 0
        %404 = vmatpush1.bf16.msra.mxu0 %v365
        %405 = vmatprep.subr.bf16.mxu0 0
        %406 = vmatpush1.bf16.msra.mxu0 %v366
        %407 = vmatprep.subr.bf16.mxu0 0
        %408 = vmatpush1.bf16.msra.mxu0 %v367
        %409 = vmatprep.subr.bf16.mxu0 0
        %410 = vmatpush1.bf16.msra.mxu0 %v368
        %411 = vmatprep.subr.bf16.mxu0 0
        %412 = vmatpush1.bf16.msra.mxu0 %v369
        %413 = vmatprep.subr.bf16.mxu0 0
        %414 = vmatpush1.bf16.msra.mxu0 %v370
        %415 = vmatprep.subr.bf16.mxu0 0
        %416 = vmatpush1.bf16.msra.mxu0 %v371
        %417 = vmatprep.subr.bf16.mxu0 0
        %418 = vmatpush1.bf16.msra.mxu0 %v372
        %419 = vmatprep.subr.bf16.mxu0 0
        %420 = vmatpush1.bf16.msra.mxu0 %v373
        %421 = vmatprep.subr.bf16.mxu0 0
        %422 = vmatpush1.bf16.msra.mxu0 %v374
        %423 = vmatprep.mubr.bf16.mxu0 %v292
        %424 = vmatmul.mubr.bf16.gmra.mrb[0].mxu0 %v285
        %v425 = vpop.f32.mrb[0].mxu0
        %v426 = vadd.f32 0.0, %v425
        %v427 = vpop.f32.mrb[0].mxu0
        %v428 = vpop.f32.mrb[0].mxu0
        %v429 = vpop.f32.mrb[0].mxu0
        %430 = vdwg.mxu0
        %v431 = vadd.f32 %v236, %v426
        %432 = vst [vmem:[%s229] sm:$0x3] %v431
        %p433 = scmp.lt.s32.totalorder %s23, 1
        %s434 = scalar_select %p433, %s23, 1
        %s435 = smul.addr %s434, 2
        %s436 = scalar_lea.vmem %s2, %s435
        // Predicated region
        $region41: #{mimlp_apply.1} parent=27 // pred_check
          %p437 = pneg %p109
        $region42: #{mimlp_apply.1} parent=27 // pred_check_branch
          %439 = sbr.rel (%p437) target = $region44
        $region43: #{mimlp_apply.1} parent=27 // pred_region
          _
        $region44: #{mimlp_apply.1} parent=27 // pred_fallthru
          _
      $region28: #{mimlp_apply.1} parent=5 // pred_fallthru
        _
      %p440 = scmp.le.s32.totalorder 2, %s14
      // Predicated region
      $region45: #{mimlp_apply.1} parent=5 // pred_check
        %p441 = pneg %p440
      $region46: #{mimlp_apply.1} parent=5 // pred_check_branch
        %443 = sbr.rel (%p441) target = $region48
      $region47: #{mimlp_apply.1} parent=5 // pred_region
        %s444 = ssub.s32 %s14, 2
        // Predicated region
        $region49: #{mimlp_apply.1} parent=47 // pred_check
          %p445 = pneg %p115
        $region50: #{mimlp_apply.1} parent=47 // pred_check_branch
          %447 = sbr.rel (%p445) target = $region52
        $region51: #{mimlp_apply.1} parent=47 // pred_region
          %p448 = scmp.lt.s32.totalorder %s25, 1
          %s449 = scalar_select %p448, %s25, 1
          %s450 = smul.addr %s449, 2
          %s451 = scalar_lea.vmem %s2, %s450
        $region52: #{mimlp_apply.1} parent=47 // pred_fallthru
          _
      $region48: #{mimlp_apply.1} parent=5 // pred_fallthru
        _
    $region6: #{mimlp_apply.1} parent=1 // loop_footer
      %s18 = sadd.s32 1, %s14
    $region7: #{mimlp_apply.1} parent=1 // loop_footer_branch
      %13 = sbr.rel target = $region3
    $region8: #{mimlp_apply.1} parent=1 // loop_exit
      _
    %452 = vsyncpa [#allocation3], 1
    %s453 = scalar_lea.sflag [#allocation3], 1
    %454 = vsyncpa %s453, 1
    %455 = vsyncpa [#allocation5], 1
    %s456 = scalar_lea.sflag [#allocation5], 1
    %457 = vsyncpa %s456, 1

</llo_original>
